<compile_context>
chip_gen: v5e
topology: v5e:2x2
jax: 0.10.0
libtpu: 0.0.40
codegen_flags: <defaults>
</compile_context>

<pallas_src>
import jax
import jax.numpy as jnp
import numpy as np
from jax.experimental import pallas as pl
from jax.experimental.pallas import tpu as pltpu


_NEG = -1e30  # "minus infinity" for padded class columns (finite -> no inf math)


def _round_up(x, m):
    return (x + m - 1) // m * m


# ---------------------------------------------------------------------------
# Kernel
# ---------------------------------------------------------------------------
def bimodal_kernel(eeg_ref, fnirs_ref, we_ref, wf_ref, wct_ref, wcb_ref,
                   bc_ref, out_ref):
    # subnet feature extractors (Linear; biases folded into bc_eff host-side)
    x = jnp.dot(eeg_ref[...], we_ref[...], preferred_element_type=jnp.float32)
    y = jnp.dot(fnirs_ref[...], wf_ref[...], preferred_element_type=jnp.float32)

    # classifier without the lane-axis concat:
    #   concat([x, y], 1) @ Wc + bc == x @ Wc_top + y @ Wc_bot + bc_eff
    logits = (jnp.dot(x, wct_ref[...], preferred_element_type=jnp.float32)
              + jnp.dot(y, wcb_ref[...], preferred_element_type=jnp.float32)
              + bc_ref[...])

    # LogSoftmax(dim=1); padded class columns carry bias -1e30 -> exp() == 0,
    # so the result over real columns matches the unpadded log-softmax.
    m = jnp.max(logits, axis=1, keepdims=True)
    shifted = logits - m
    lse = jnp.log(jnp.sum(jnp.exp(shifted), axis=1, keepdims=True))
    out_ref[...] = shifted - lse


# ---------------------------------------------------------------------------
# Host-side weight prep: split classifier, fold biases, pad, cast
# ---------------------------------------------------------------------------
def prepare_fused_params(params, d_eeg, d_fnirs):
    We, be = params["We"], params["be"]
    Wf, bf = params["Wf"], params["bf"]
    Wc, bc = params["Wc"], params["bc"]
    feat_e, feat_f = We.shape[1], Wf.shape[1]
    n_classes = Wc.shape[1]

    d_eeg_p = _round_up(d_eeg, 128)
    d_fnirs_p = _round_up(d_fnirs, 128)
    fe_p = _round_up(feat_e, 128)
    ff_p = _round_up(feat_f, 128)
    n_p = _round_up(n_classes, 128)

    # split classifier weight along the concat axis
    Wc_top = Wc[:feat_e]
    Wc_bot = Wc[feat_e:]
    # fold the (purely linear) subnet biases into one effective classifier bias
    bc_eff = be @ Wc_top + bf @ Wc_bot + bc          # (1, n_classes)

    def pad2(a, rows, cols):
        out = jnp.zeros((rows, cols), jnp.float32)
        return out.at[: a.shape[0], : a.shape[1]].set(a.astype(jnp.float32))

    return {
        "d_eeg_p": d_eeg_p, "d_fnirs_p": d_fnirs_p,
        "fe_p": fe_p, "ff_p": ff_p, "n_p": n_p, "n_classes": n_classes,
        # big subnet weights -> bf16 (dominant HBM traffic)
        "We_p": pad2(We, d_eeg_p, fe_p).astype(jnp.bfloat16),
        "Wf_p": pad2(Wf, d_fnirs_p, ff_p).astype(jnp.bfloat16),
        # tiny classifier weights kept in f32 (feature activations are f32)
        "Wct_p": pad2(Wc_top, fe_p, n_p),
        "Wcb_p": pad2(Wc_bot, ff_p, n_p),
        "bc_p": jnp.full((1, n_p), _NEG, jnp.float32)
                   .at[:, :n_classes].set(bc_eff.astype(jnp.float32)),
    }


# ---------------------------------------------------------------------------
# Forward wrapper
# ---------------------------------------------------------------------------
def bimodal_forward(eeg, fnirs, params, *, block_b=256):
    """eeg: (B, Ce, He, We) NCHW ; fnirs: (B, Cf, Hf, Wf) NCHW."""
    B = eeg.shape[0]
    d_eeg = int(np.prod(eeg.shape[1:]))
    d_fnirs = int(np.prod(fnirs.shape[1:]))

    fp = prepare_fused_params(params, d_eeg, d_fnirs)
    d_eeg_p, d_fnirs_p = fp["d_eeg_p"], fp["d_fnirs_p"]
    fe_p, ff_p, n_p = fp["fe_p"], fp["ff_p"], fp["n_p"]
    n_classes = fp["n_classes"]

    # batch tiling: multiple of 8, bounded by block_b; pad batch with zero rows
    b_tile = min(block_b, _round_up(B, 8))
    b_pad = _round_up(B, b_tile)

    def flat_pad(x, d, d_p):
        xf = x.reshape(B, d)                              # torch .view(B, -1)
        out = jnp.zeros((b_pad, d_p), jnp.bfloat16)
        return out.at[:B, :d].set(xf.astype(jnp.bfloat16))

    eeg_f = flat_pad(eeg, d_eeg, d_eeg_p)
    fnirs_f = flat_pad(fnirs, d_fnirs, d_fnirs_p)

    flops = 2 * b_pad * (d_eeg_p * fe_p + d_fnirs_p * ff_p
                         + (fe_p + ff_p) * n_p)
    bytes_accessed = (eeg_f.size * 2 + fnirs_f.size * 2
                      + fp["We_p"].size * 2 + fp["Wf_p"].size * 2
                      + fp["Wct_p"].size * 4 + fp["Wcb_p"].size * 4
                      + fp["bc_p"].size * 4 + b_pad * n_p * 4)

    out = pl.pallas_call(
        bimodal_kernel,
        out_shape=jax.ShapeDtypeStruct((b_pad, n_p), jnp.float32),
        grid_spec=pltpu.PrefetchScalarGridSpec(
            num_scalar_prefetch=0,
            grid=(b_pad // b_tile,),
            in_specs=[
                pl.BlockSpec((b_tile, d_eeg_p), lambda i: (i, 0)),
                pl.BlockSpec((b_tile, d_fnirs_p), lambda i: (i, 0)),
                pl.BlockSpec((d_eeg_p, fe_p), lambda i: (0, 0)),
                pl.BlockSpec((d_fnirs_p, ff_p), lambda i: (0, 0)),
                pl.BlockSpec((fe_p, n_p), lambda i: (0, 0)),
                pl.BlockSpec((ff_p, n_p), lambda i: (0, 0)),
                pl.BlockSpec((1, n_p), lambda i: (0, 0)),
            ],
            out_specs=pl.BlockSpec((b_tile, n_p), lambda i: (i, 0)),
        ),
        compiler_params=pltpu.CompilerParams(
            dimension_semantics=("parallel",),
        ),
        cost_estimate=pl.CostEstimate(
            flops=int(flops),
            transcendentals=int(b_pad * (n_p + 1)),
            bytes_accessed=int(bytes_accessed),
        ),
    )(eeg_f, fnirs_f, fp["We_p"], fp["Wf_p"], fp["Wct_p"], fp["Wcb_p"],
      fp["bc_p"])

    return out[:B, :n_classes]


# ---------------------------------------------------------------------------
# Parameter init (matches apply_initialization: xavier for subnets,
# kaiming(relu) for classifier, zero biases)
# ---------------------------------------------------------------------------
def xavier_uniform(key, fan_in, fan_out):
    bound = float(np.sqrt(6.0 / (fan_in + fan_out)))
    return jax.random.uniform(key, (fan_in, fan_out), jnp.float32, -bound, bound)


def kaiming_uniform_relu(key, fan_in, fan_out):
    bound = float(np.sqrt(2.0) * np.sqrt(3.0 / fan_in))
    return jax.random.uniform(key, (fan_in, fan_out), jnp.float32, -bound, bound)


def make_params(key, d_eeg, d_fnirs, feat_eeg, feat_fnirs, n_classes):
    k1, k2, k3 = jax.random.split(key, 3)
    hid = feat_eeg + feat_fnirs
    return {
        "We": xavier_uniform(k1, d_eeg, feat_eeg),
        "be": jnp.zeros((1, feat_eeg), jnp.float32),
        "Wf": xavier_uniform(k2, d_fnirs, feat_fnirs),
        "bf": jnp.zeros((1, feat_fnirs), jnp.float32),
        "Wc": kaiming_uniform_relu(k3, hid, n_classes),
        "bc": jnp.zeros((1, n_classes), jnp.float32),
    }


def reference_forward(eeg, fnirs, params):
    """Pure-JAX f32 reference matching the PyTorch forward."""
    B = eeg.shape[0]
    x = eeg.reshape(B, -1).astype(jnp.float32) @ params["We"] + params["be"]
    y = fnirs.reshape(B, -1).astype(jnp.float32) @ params["Wf"] + params["bf"]
    feat = jnp.concatenate([x, y], axis=1)
    logits = feat @ params["Wc"] + params["bc"]
    return jax.nn.log_softmax(logits, axis=1)


if __name__ == "__main__":
    key = jax.random.PRNGKey(0)
    kx, ky, kp = jax.random.split(key, 3)

    # small shapes: eeg (B, C, H, W) = (2, 4, 16, 16); fnirs = (2, 4, 8, 8)
    B = 2
    eeg = jax.random.normal(kx, (B, 4, 16, 16), jnp.float32)
    fnirs = jax.random.normal(ky, (B, 4, 8, 8), jnp.float32)

    d_eeg = 4 * 16 * 16
    d_fnirs = 4 * 8 * 8
    feat_eeg, feat_fnirs = 32, 32     # dim_feat of each subnet
    n_classes = 4                     # > 1 -> LogSoftmax branch

    params = make_params(kp, d_eeg, d_fnirs, feat_eeg, feat_fnirs, n_classes)

    out = bimodal_forward(eeg, fnirs, params)
    out = jax.block_until_ready(out)

    # sanity 1: shape + log-softmax rows exponentiate-sum to ~1
    assert out.shape == (B, n_classes)
    row_sums = jnp.sum(jnp.exp(out), axis=1)
    assert bool(jnp.all(jnp.abs(row_sums - 1.0) < 1e-3))

    # sanity 2: matches pure-JAX f32 reference (bf16 input/weight cast tolerance)
    ref = reference_forward(eeg, fnirs, params)
    assert bool(jnp.allclose(out, ref, atol=1e-1, rtol=5e-2)), (
        f"max abs err {float(jnp.max(jnp.abs(out - ref)))}")

    print("KERNEL_OK")
</pallas_src>

<mosaic_0001>
module attributes {stable_mosaic.version = 11 : i64} {
  func.func @bimodal_kernel(%arg0: i32, %arg1: memref<8x1024xbf16, #tpu.memory_space<vmem>>, %arg2: memref<8x256xbf16, #tpu.memory_space<vmem>>, %arg3: memref<1024x128xbf16, #tpu.memory_space<vmem>>, %arg4: memref<256x128xbf16, #tpu.memory_space<vmem>>, %arg5: memref<128x128xf32, #tpu.memory_space<vmem>>, %arg6: memref<128x128xf32, #tpu.memory_space<vmem>>, %arg7: memref<1x128xf32, #tpu.memory_space<vmem>>, %arg8: memref<8x128xf32, #tpu.memory_space<vmem>>) attributes {dimension_semantics = [#tpu.dimension_semantics<parallel>], iteration_bounds = array<i64: 1>, scalar_prefetch = 0 : i64, scratch_operands = 0 : i64, tpu.core_type = #tpu.core_type<tc>, window_params = [{transform_indices = @transform_0, window_bounds = array<i64: 8, 1024>}, {transform_indices = @transform_1, window_bounds = array<i64: 8, 256>}, {pipeline_mode = #tpu.pipeline_mode<synchronous>, transform_indices = @transform_2, window_bounds = array<i64: 1024, 128>}, {pipeline_mode = #tpu.pipeline_mode<synchronous>, transform_indices = @transform_3, window_bounds = array<i64: 256, 128>}, {pipeline_mode = #tpu.pipeline_mode<synchronous>, transform_indices = @transform_4, window_bounds = array<i64: 128, 128>}, {pipeline_mode = #tpu.pipeline_mode<synchronous>, transform_indices = @transform_5, window_bounds = array<i64: 128, 128>}, {pipeline_mode = #tpu.pipeline_mode<synchronous>, transform_indices = @transform_6, window_bounds = array<i64: 1, 128>}, {transform_indices = @transform_7, window_bounds = array<i64: 8, 128>}]} {
    %c0 = arith.constant 0 : index
    %c0_0 = arith.constant 0 : index
    %0 = vector.load %arg1[%c0, %c0_0] : memref<8x1024xbf16, #tpu.memory_space<vmem>>, vector<8x1024xbf16>
    %c0_1 = arith.constant 0 : index
    %c0_2 = arith.constant 0 : index
    %1 = vector.load %arg3[%c0_1, %c0_2] : memref<1024x128xbf16, #tpu.memory_space<vmem>>, vector<1024x128xbf16>
    %cst = arith.constant dense<0.000000e+00> : vector<8x128xf32>
    %2 = tpu.matmul %0, %1, %cst {dimension_numbers = #tpu.dot_dimension_numbers<[1], [0], [0], [1], [0, 0, 1, 1], [], []>} : vector<8x1024xbf16>, vector<1024x128xbf16>, vector<8x128xf32> -> vector<8x128xf32>
    %c0_3 = arith.constant 0 : index
    %c0_4 = arith.constant 0 : index
    %3 = vector.load %arg2[%c0_3, %c0_4] : memref<8x256xbf16, #tpu.memory_space<vmem>>, vector<8x256xbf16>
    %c0_5 = arith.constant 0 : index
    %c0_6 = arith.constant 0 : index
    %4 = vector.load %arg4[%c0_5, %c0_6] : memref<256x128xbf16, #tpu.memory_space<vmem>>, vector<256x128xbf16>
    %cst_7 = arith.constant dense<0.000000e+00> : vector<8x128xf32>
    %5 = tpu.matmul %3, %4, %cst_7 {dimension_numbers = #tpu.dot_dimension_numbers<[1], [0], [0], [1], [0, 0, 1, 1], [], []>} : vector<8x256xbf16>, vector<256x128xbf16>, vector<8x128xf32> -> vector<8x128xf32>
    %c0_8 = arith.constant 0 : index
    %c0_9 = arith.constant 0 : index
    %6 = vector.load %arg5[%c0_8, %c0_9] : memref<128x128xf32, #tpu.memory_space<vmem>>, vector<128x128xf32>
    %cst_10 = arith.constant dense<0.000000e+00> : vector<8x128xf32>
    %7 = tpu.matmul %2, %6, %cst_10 {dimension_numbers = #tpu.dot_dimension_numbers<[1], [0], [0], [1], [0, 0, 1, 1], [], []>} : vector<8x128xf32>, vector<128x128xf32>, vector<8x128xf32> -> vector<8x128xf32>
    %c0_11 = arith.constant 0 : index
    %c0_12 = arith.constant 0 : index
    %8 = vector.load %arg6[%c0_11, %c0_12] : memref<128x128xf32, #tpu.memory_space<vmem>>, vector<128x128xf32>
    %cst_13 = arith.constant dense<0.000000e+00> : vector<8x128xf32>
    %9 = tpu.matmul %5, %8, %cst_13 {dimension_numbers = #tpu.dot_dimension_numbers<[1], [0], [0], [1], [0, 0, 1, 1], [], []>} : vector<8x128xf32>, vector<128x128xf32>, vector<8x128xf32> -> vector<8x128xf32>
    %10 = arith.addf %7, %9 : vector<8x128xf32>
    %c0_14 = arith.constant 0 : index
    %c0_15 = arith.constant 0 : index
    %11 = vector.load %arg7[%c0_14, %c0_15] : memref<1x128xf32, #tpu.memory_space<vmem>>, vector<1x128xf32>
    %12 = vector.broadcast %11 : vector<1x128xf32> to vector<8x128xf32>
    %13 = arith.addf %10, %12 : vector<8x128xf32>
    %cst_16 = arith.constant dense<0xFF800000> : vector<8xf32>
    %14 = vector.multi_reduction <maximumf>, %13, %cst_16 [1] : vector<8x128xf32> to vector<8xf32>
    %15 = vector.shape_cast %14 : vector<8xf32> to vector<8x1xf32>
    %16 = vector.broadcast %15 : vector<8x1xf32> to vector<8x128xf32>
    %17 = arith.subf %13, %16 : vector<8x128xf32>
    %18 = math.exp %17 : vector<8x128xf32>
    %cst_17 = arith.constant dense<0.000000e+00> : vector<8xf32>
    %19 = vector.multi_reduction <add>, %18, %cst_17 [1] : vector<8x128xf32> to vector<8xf32>
    %20 = vector.shape_cast %19 : vector<8xf32> to vector<8x1xf32>
    %21 = math.log %20 : vector<8x1xf32>
    %22 = vector.broadcast %21 : vector<8x1xf32> to vector<8x128xf32>
    %23 = arith.subf %17, %22 : vector<8x128xf32>
    %c0_18 = arith.constant 0 : index
    %c0_19 = arith.constant 0 : index
    %24 = vector.load %arg8[%c0_18, %c0_19] : memref<8x128xf32, #tpu.memory_space<vmem>>, vector<8x128xf32>
    tpu.vector_store %arg8[%c0_18, %c0_19], %23 {strides = array<i32>} : memref<8x128xf32, #tpu.memory_space<vmem>>, vector<8x128xf32>,
    return
  }
  func.func @transform_0(%arg0: i32) -> (i32, i32) {
    %c0_i32 = arith.constant 0 : i32
    %c0_i32_0 = arith.constant 0 : i32
    return %arg0, %c0_i32 : i32, i32
  }
  func.func @transform_1(%arg0: i32) -> (i32, i32) {
    %c0_i32 = arith.constant 0 : i32
    %c0_i32_0 = arith.constant 0 : i32
    return %arg0, %c0_i32 : i32, i32
  }
  func.func @transform_2(%arg0: i32) -> (i32, i32) {
    %c0_i32 = arith.constant 0 : i32
    %c0_i32_0 = arith.constant 0 : i32
    %c0_i32_1 = arith.constant 0 : i32
    return %c0_i32, %c0_i32_0 : i32, i32
  }
  func.func @transform_3(%arg0: i32) -> (i32, i32) {
    %c0_i32 = arith.constant 0 : i32
    %c0_i32_0 = arith.constant 0 : i32
    %c0_i32_1 = arith.constant 0 : i32
    return %c0_i32, %c0_i32_0 : i32, i32
  }
  func.func @transform_4(%arg0: i32) -> (i32, i32) {
    %c0_i32 = arith.constant 0 : i32
    %c0_i32_0 = arith.constant 0 : i32
    %c0_i32_1 = arith.constant 0 : i32
    return %c0_i32, %c0_i32_0 : i32, i32
  }
  func.func @transform_5(%arg0: i32) -> (i32, i32) {
    %c0_i32 = arith.constant 0 : i32
    %c0_i32_0 = arith.constant 0 : i32
    %c0_i32_1 = arith.constant 0 : i32
    return %c0_i32, %c0_i32_0 : i32, i32
  }
  func.func @transform_6(%arg0: i32) -> (i32, i32) {
    %c0_i32 = arith.constant 0 : i32
    %c0_i32_0 = arith.constant 0 : i32
    %c0_i32_1 = arith.constant 0 : i32
    return %c0_i32, %c0_i32_0 : i32, i32
  }
  func.func @transform_7(%arg0: i32) -> (i32, i32) {
    %c0_i32 = arith.constant 0 : i32
    %c0_i32_0 = arith.constant 0 : i32
    return %arg0, %c0_i32 : i32, i32
  }
}

</mosaic_0001>

<llo_original>
// kernel: tpu_custom_call.1
$region0: #{tpu_custom_call.1}
  #allocation0 [shape = 'u32[]', space=smem, size = 0x4, offset = 0x4, fixed_abs, tag = 'smem constant byte address 0x4 - core index']
  #allocation1 [shape = 'u32[72,128]{1,0:T(1,128)}', space=vmem, size = 0x9000, scoped, tag = 'internal scratch']
  %s0 = inlined_call_operand.hbm [shape: bf16[8,1024], index: 0, kind: input, shape index: {}]
  %s1 = inlined_call_operand.hbm [shape: bf16[8,256], index: 1, kind: input, shape index: {}]
  %s2 = inlined_call_operand.hbm [shape: bf16[1024,128], index: 2, kind: input, shape index: {}]
  %s3 = inlined_call_operand.hbm [shape: bf16[256,128], index: 3, kind: input, shape index: {}]
  %s4 = inlined_call_operand.hbm [shape: f32[128,128], index: 4, kind: input, shape index: {}]
  %s5 = inlined_call_operand.hbm [shape: f32[128,128], index: 5, kind: input, shape index: {}]
  %s6 = inlined_call_operand.vmem [shape: f32[1,128], index: 6, kind: input, shape index: {}]
  %s7 = inlined_call_operand.hbm [shape: f32[8,128], index: 7, kind: output, shape index: {}]
  %s8 = sld [smem:[#allocation0]]
  $region62: #{tpu_custom_call.1} parent=0
    _
  %s10 = ssub.s32 1, %s8
  %s11 = scalar_select 0, %s10, %s8
  $region1: #{tpu_custom_call.1} parent=0
    #allocation2 [shape = 'u8[16384]{0}', space=vmem, size = 0x4000, scoped, tag = 'input window, operand 0, single buffered']
    #allocation3 [shape = 's32[1]{0}', space=sflag, size = 0x4, scoped, tag = 'scoped memory for tpu_custom_call.1']
    #allocation4 [shape = 's32[1]{0}', space=sflag, size = 0x4, scoped, tag = 'scoped memory for tpu_custom_call.1']
    #allocation5 [shape = 'u8[4096]{0}', space=vmem, size = 0x1000, scoped, tag = 'input window, operand 1, single buffered']
    #allocation6 [shape = 's32[1]{0}', space=sflag, size = 0x4, scoped, tag = 'scoped memory for tpu_custom_call.1']
    #allocation7 [shape = 'u8[262144]{0}', space=vmem, size = 0x40000, scoped, tag = 'input window, operand 2, single buffered']
    #allocation8 [shape = 'u8[65536]{0}', space=vmem, size = 0x10000, scoped, tag = 'input window, operand 3, single buffered']
    #allocation9 [shape = 's32[1]{0}', space=sflag, size = 0x4, scoped, tag = 'scoped memory for tpu_custom_call.1']
    #allocation10 [shape = 'u8[65536]{0}', space=vmem, size = 0x10000, scoped, tag = 'input window, operand 4, single buffered']
    #allocation11 [shape = 'u8[65536]{0}', space=vmem, size = 0x10000, scoped, tag = 'input window, operand 5, single buffered']
    #allocation12 [shape = 's32[1]{0}', space=sflag, size = 0x4, scoped, tag = 'scoped memory for tpu_custom_call.1']
    #allocation13 [shape = 'u8[4096]{0}', space=vmem, size = 0x1000, scoped, tag = 'output window, operand 0, single buffered']
    %12 = vsyncpa [#allocation3], 0
    %13 = vsyncpa [#allocation6], 0
    %14 = vsyncpa [#allocation9], 0
    %15 = vsyncpa [#allocation12], 0
    %16 = vsyncpa [#allocation4], 0
    // Predicated region
    $region2: #{tpu_custom_call.1} parent=1 // pred_check
      _
    $region3: #{tpu_custom_call.1} parent=1 // pred_check_branch
      %18 = sbr.rel (0) target = $region5
    $region4: #{tpu_custom_call.1} parent=1 // pred_region
      %20 = vsyncadd [#allocation3], 0
      %s22 = sshll.u32 %s0, 4
      %s23 = int_to_ptr.hbm [resolvable:$true] %s22
      %s24 = sshll.u32 [#allocation2], 4
      %s25 = int_to_ptr.vmem [resolvable:$true] %s24
      %27 = dma.hbm_to_vmem [thread:$0]  %s23, 512, %s25, [#allocation3]
    $region5: #{tpu_custom_call.1} parent=1 // pred_fallthru
      _
    // Predicated region
    $region6: #{tpu_custom_call.1} parent=1 // pred_check
      _
    $region7: #{tpu_custom_call.1} parent=1 // pred_check_branch
      %29 = sbr.rel (0) target = $region9
    $region8: #{tpu_custom_call.1} parent=1 // pred_region
      %31 = vsyncadd [#allocation6], 0
      %s33 = sshll.u32 %s1, 4
      %s34 = int_to_ptr.hbm [resolvable:$true] %s33
      %s35 = sshll.u32 [#allocation5], 4
      %s36 = int_to_ptr.vmem [resolvable:$true] %s35
      %38 = dma.hbm_to_vmem [thread:$0]  %s34, 128, %s36, [#allocation6]
    $region9: #{tpu_custom_call.1} parent=1 // pred_fallthru
      _
    // Predicated region
    $region10: #{tpu_custom_call.1} parent=1 // pred_check
      _
    $region11: #{tpu_custom_call.1} parent=1 // pred_check_branch
      %40 = sbr.rel (0) target = $region13
    $region12: #{tpu_custom_call.1} parent=1 // pred_region
      %42 = vsyncadd [#allocation6], 0
      %s43 = sshll.u32 %s2, 4
      %s44 = int_to_ptr.hbm [resolvable:$true] %s43
      %s45 = sshll.u32 [#allocation7], 4
      %s46 = int_to_ptr.vmem [resolvable:$true] %s45
      %51 = dma.hbm_to_vmem [thread:$0]  %s44, 8192, %s46, [#allocation6], 64, 64, 4
    $region13: #{tpu_custom_call.1} parent=1 // pred_fallthru
      _
    // Predicated region
    $region14: #{tpu_custom_call.1} parent=1 // pred_check
      _
    $region15: #{tpu_custom_call.1} parent=1 // pred_check_branch
      %53 = sbr.rel (0) target = $region17
    $region16: #{tpu_custom_call.1} parent=1 // pred_region
      %55 = vsyncadd [#allocation9], 0
      %s56 = sshll.u32 %s3, 4
      %s57 = int_to_ptr.hbm [resolvable:$true] %s56
      %s58 = sshll.u32 [#allocation8], 4
      %s59 = int_to_ptr.vmem [resolvable:$true] %s58
      %64 = dma.hbm_to_vmem [thread:$0]  %s57, 2048, %s59, [#allocation9], 64, 64, 4
    $region17: #{tpu_custom_call.1} parent=1 // pred_fallthru
      _
    // Predicated region
    $region18: #{tpu_custom_call.1} parent=1 // pred_check
      _
    $region19: #{tpu_custom_call.1} parent=1 // pred_check_branch
      %66 = sbr.rel (0) target = $region21
    $region20: #{tpu_custom_call.1} parent=1 // pred_region
      %68 = vsyncadd [#allocation9], 0
      %s69 = sshll.u32 %s4, 4
      %s70 = int_to_ptr.hbm [resolvable:$true] %s69
      %s71 = sshll.u32 [#allocation10], 4
      %s72 = int_to_ptr.vmem [resolvable:$true] %s71
      %77 = dma.hbm_to_vmem [thread:$0]  %s70, 2048, %s72, [#allocation9], 128, 128, 8
    $region21: #{tpu_custom_call.1} parent=1 // pred_fallthru
      _
    // Predicated region
    $region22: #{tpu_custom_call.1} parent=1 // pred_check
      _
    $region23: #{tpu_custom_call.1} parent=1 // pred_check_branch
      %79 = sbr.rel (0) target = $region25
    $region24: #{tpu_custom_call.1} parent=1 // pred_region
      %81 = vsyncadd [#allocation12], 0
      %s82 = sshll.u32 %s5, 4
      %s83 = int_to_ptr.hbm [resolvable:$true] %s82
      %s84 = sshll.u32 [#allocation11], 4
      %s85 = int_to_ptr.vmem [resolvable:$true] %s84
      %90 = dma.hbm_to_vmem [thread:$0]  %s83, 2048, %s85, [#allocation12], 128, 128, 8
    $region25: #{tpu_custom_call.1} parent=1 // pred_fallthru
      _
    // Predicated region
    $region26: #{tpu_custom_call.1} parent=1 // pred_check
      _
    $region27: #{tpu_custom_call.1} parent=1 // pred_check_branch
      %92 = sbr.rel (0) target = $region29
    $region28: #{tpu_custom_call.1} parent=1 // pred_region
      _
    $region29: #{tpu_custom_call.1} parent=1 // pred_fallthru
      _
    // Predicated region
    $region30: #{tpu_custom_call.1} parent=1 // pred_check
      _
    $region31: #{tpu_custom_call.1} parent=1 // pred_check_branch
      %94 = sbr.rel (0) target = $region33
    $region32: #{tpu_custom_call.1} parent=1 // pred_region
      %96 = dma.done [#allocation3], 512
    $region33: #{tpu_custom_call.1} parent=1 // pred_fallthru
      _
    // Predicated region
    $region34: #{tpu_custom_call.1} parent=1 // pred_check
      _
    $region35: #{tpu_custom_call.1} parent=1 // pred_check_branch
      %98 = sbr.rel (0) target = $region37
    $region36: #{tpu_custom_call.1} parent=1 // pred_region
      %100 = dma.done [#allocation6], 128
    $region37: #{tpu_custom_call.1} parent=1 // pred_fallthru
      _
    // Predicated region
    $region38: #{tpu_custom_call.1} parent=1 // pred_check
      _
    $region39: #{tpu_custom_call.1} parent=1 // pred_check_branch
      %102 = sbr.rel (0) target = $region41
    $region40: #{tpu_custom_call.1} parent=1 // pred_region
      %104 = dma.done [#allocation6], 8192
    $region41: #{tpu_custom_call.1} parent=1 // pred_fallthru
      _
    // Predicated region
    $region42: #{tpu_custom_call.1} parent=1 // pred_check
      _
    $region43: #{tpu_custom_call.1} parent=1 // pred_check_branch
      %106 = sbr.rel (0) target = $region45
    $region44: #{tpu_custom_call.1} parent=1 // pred_region
      %108 = dma.done [#allocation9], 2048
    $region45: #{tpu_custom_call.1} parent=1 // pred_fallthru
      _
    // Predicated region
    $region46: #{tpu_custom_call.1} parent=1 // pred_check
      _
    $region47: #{tpu_custom_call.1} parent=1 // pred_check_branch
      %110 = sbr.rel (0) target = $region49
    $region48: #{tpu_custom_call.1} parent=1 // pred_region
      %112 = dma.done [#allocation9], 2048
    $region49: #{tpu_custom_call.1} parent=1 // pred_fallthru
      _
    // Predicated region
    $region50: #{tpu_custom_call.1} parent=1 // pred_check
      _
    $region51: #{tpu_custom_call.1} parent=1 // pred_check_branch
      %114 = sbr.rel (0) target = $region53
    $region52: #{tpu_custom_call.1} parent=1 // pred_region
      %116 = dma.done [#allocation12], 2048
    $region53: #{tpu_custom_call.1} parent=1 // pred_fallthru
      _
    %v117 = vld [vmem:[#allocation2] sm:$0xff]
    %v118 = vld [vmem:[#allocation2 + $0x8] sm:$0xff]
    %v119 = vld [vmem:[#allocation2 + $0x10] sm:$0xff]
    %v120 = vld [vmem:[#allocation2 + $0x18] sm:$0xff]
    %v121 = vld [vmem:[#allocation7] sm:$0xf]
    %v122 = vld [vmem:[#allocation7 + $0x4] sm:$0xf]
    %v123 = vld [vmem:[#allocation7 + $0x8] sm:$0xf]
    %v124 = vld [vmem:[#allocation7 + $0xc] sm:$0xf]
    %v125 = vld [vmem:[#allocation7 + $0x10] sm:$0xf]
    %v126 = vld [vmem:[#allocation7 + $0x14] sm:$0xf]
    %v127 = vld [vmem:[#allocation7 + $0x18] sm:$0xf]
    %v128 = vld [vmem:[#allocation7 + $0x1c] sm:$0xf]
    %v129 = vld [vmem:[#allocation7 + $0x20] sm:$0xf]
    %v130 = vld [vmem:[#allocation7 + $0x24] sm:$0xf]
    %v131 = vld [vmem:[#allocation7 + $0x28] sm:$0xf]
    %v132 = vld [vmem:[#allocation7 + $0x2c] sm:$0xf]
    %v133 = vld [vmem:[#allocation7 + $0x30] sm:$0xf]
    %v134 = vld [vmem:[#allocation7 + $0x34] sm:$0xf]
    %v135 = vld [vmem:[#allocation7 + $0x38] sm:$0xf]
    %v136 = vld [vmem:[#allocation7 + $0x3c] sm:$0xf]
    %v137 = vld [vmem:[#allocation7 + $0x40] sm:$0xf]
    %v138 = vld [vmem:[#allocation7 + $0x44] sm:$0xf]
    %v139 = vld [vmem:[#allocation7 + $0x48] sm:$0xf]
    %v140 = vld [vmem:[#allocation7 + $0x4c] sm:$0xf]
    %v141 = vld [vmem:[#allocation7 + $0x50] sm:$0xf]
    %v142 = vld [vmem:[#allocation7 + $0x54] sm:$0xf]
    %v143 = vld [vmem:[#allocation7 + $0x58] sm:$0xf]
    %v144 = vld [vmem:[#allocation7 + $0x5c] sm:$0xf]
    %v145 = vld [vmem:[#allocation7 + $0x60] sm:$0xf]
    %v146 = vld [vmem:[#allocation7 + $0x64] sm:$0xf]
    %v147 = vld [vmem:[#allocation7 + $0x68] sm:$0xf]
    %v148 = vld [vmem:[#allocation7 + $0x6c] sm:$0xf]
    %v149 = vld [vmem:[#allocation7 + $0x70] sm:$0xf]
    %v150 = vld [vmem:[#allocation7 + $0x74] sm:$0xf]
    %v151 = vld [vmem:[#allocation7 + $0x78] sm:$0xf]
    %v152 = vld [vmem:[#allocation7 + $0x7c] sm:$0xf]
    %v153 = vld [vmem:[#allocation7 + $0x80] sm:$0xf]
    %v154 = vld [vmem:[#allocation7 + $0x84] sm:$0xf]
    %v155 = vld [vmem:[#allocation7 + $0x88] sm:$0xf]
    %v156 = vld [vmem:[#allocation7 + $0x8c] sm:$0xf]
    %v157 = vld [vmem:[#allocation7 + $0x90] sm:$0xf]
    %v158 = vld [vmem:[#allocation7 + $0x94] sm:$0xf]
    %v159 = vld [vmem:[#allocation7 + $0x98] sm:$0xf]
    %v160 = vld [vmem:[#allocation7 + $0x9c] sm:$0xf]
    %v161 = vld [vmem:[#allocation7 + $0xa0] sm:$0xf]
    %v162 = vld [vmem:[#allocation7 + $0xa4] sm:$0xf]
    %v163 = vld [vmem:[#allocation7 + $0xa8] sm:$0xf]
    %v164 = vld [vmem:[#allocation7 + $0xac] sm:$0xf]
    %v165 = vld [vmem:[#allocation7 + $0xb0] sm:$0xf]
    %v166 = vld [vmem:[#allocation7 + $0xb4] sm:$0xf]
    %v167 = vld [vmem:[#allocation7 + $0xb8] sm:$0xf]
    %v168 = vld [vmem:[#allocation7 + $0xbc] sm:$0xf]
    %v169 = vld [vmem:[#allocation7 + $0xc0] sm:$0xf]
    %v170 = vld [vmem:[#allocation7 + $0xc4] sm:$0xf]
    %v171 = vld [vmem:[#allocation7 + $0xc8] sm:$0xf]
    %v172 = vld [vmem:[#allocation7 + $0xcc] sm:$0xf]
    %v173 = vld [vmem:[#allocation7 + $0xd0] sm:$0xf]
    %v174 = vld [vmem:[#allocation7 + $0xd4] sm:$0xf]
    %v175 = vld [vmem:[#allocation7 + $0xd8] sm:$0xf]
    %v176 = vld [vmem:[#allocation7 + $0xdc] sm:$0xf]
    %v177 = vld [vmem:[#allocation7 + $0xe0] sm:$0xf]
    %v178 = vld [vmem:[#allocation7 + $0xe4] sm:$0xf]
    %v179 = vld [vmem:[#allocation7 + $0xe8] sm:$0xf]
    %v180 = vld [vmem:[#allocation7 + $0xec] sm:$0xf]
    %v181 = vld [vmem:[#allocation7 + $0xf0] sm:$0xf]
    %v182 = vld [vmem:[#allocation7 + $0xf4] sm:$0xf]
    %v183 = vld [vmem:[#allocation7 + $0xf8] sm:$0xf]
    %v184 = vld [vmem:[#allocation7 + $0xfc] sm:$0xf]
    %v185 = vld [vmem:[#allocation7 + $0x100] sm:$0xf]
    %v186 = vld [vmem:[#allocation7 + $0x104] sm:$0xf]
    %v187 = vld [vmem:[#allocation7 + $0x108] sm:$0xf]
    %v188 = vld [vmem:[#allocation7 + $0x10c] sm:$0xf]
    %v189 = vld [vmem:[#allocation7 + $0x110] sm:$0xf]
    %v190 = vld [vmem:[#allocation7 + $0x114] sm:$0xf]
    %v191 = vld [vmem:[#allocation7 + $0x118] sm:$0xf]
    %v192 = vld [vmem:[#allocation7 + $0x11c] sm:$0xf]
    %v193 = vld [vmem:[#allocation7 + $0x120] sm:$0xf]
    %v194 = vld [vmem:[#allocation7 + $0x124] sm:$0xf]
    %v195 = vld [vmem:[#allocation7 + $0x128] sm:$0xf]
    %v196 = vld [vmem:[#allocation7 + $0x12c] sm:$0xf]
    %v197 = vld [vmem:[#allocation7 + $0x130] sm:$0xf]
    %v198 = vld [vmem:[#allocation7 + $0x134] sm:$0xf]
    %v199 = vld [vmem:[#allocation7 + $0x138] sm:$0xf]
    %v200 = vld [vmem:[#allocation7 + $0x13c] sm:$0xf]
    %v201 = vld [vmem:[#allocation7 + $0x140] sm:$0xf]
    %v202 = vld [vmem:[#allocation7 + $0x144] sm:$0xf]
    %v203 = vld [vmem:[#allocation7 + $0x148] sm:$0xf]
    %v204 = vld [vmem:[#allocation7 + $0x14c] sm:$0xf]
    %v205 = vld [vmem:[#allocation7 + $0x150] sm:$0xf]
    %v206 = vld [vmem:[#allocation7 + $0x154] sm:$0xf]
    %v207 = vld [vmem:[#allocation7 + $0x158] sm:$0xf]
    %v208 = vld [vmem:[#allocation7 + $0x15c] sm:$0xf]
    %v209 = vld [vmem:[#allocation7 + $0x160] sm:$0xf]
    %v210 = vld [vmem:[#allocation7 + $0x164] sm:$0xf]
    %v211 = vld [vmem:[#allocation7 + $0x168] sm:$0xf]
    %v212 = vld [vmem:[#allocation7 + $0x16c] sm:$0xf]
    %v213 = vld [vmem:[#allocation7 + $0x170] sm:$0xf]
    %v214 = vld [vmem:[#allocation7 + $0x174] sm:$0xf]
    %v215 = vld [vmem:[#allocation7 + $0x178] sm:$0xf]
    %v216 = vld [vmem:[#allocation7 + $0x17c] sm:$0xf]
    %v217 = vld [vmem:[#allocation7 + $0x180] sm:$0xf]
    %v218 = vld [vmem:[#allocation7 + $0x184] sm:$0xf]
    %v219 = vld [vmem:[#allocation7 + $0x188] sm:$0xf]
    %v220 = vld [vmem:[#allocation7 + $0x18c] sm:$0xf]
    %v221 = vld [vmem:[#allocation7 + $0x190] sm:$0xf]
    %v222 = vld [vmem:[#allocation7 + $0x194] sm:$0xf]
    %v223 = vld [vmem:[#allocation7 + $0x198] sm:$0xf]
    %v224 = vld [vmem:[#allocation7 + $0x19c] sm:$0xf]
    %v225 = vld [vmem:[#allocation7 + $0x1a0] sm:$0xf]
    %v226 = vld [vmem:[#allocation7 + $0x1a4] sm:$0xf]
    %v227 = vld [vmem:[#allocation7 + $0x1a8] sm:$0xf]
    %v228 = vld [vmem:[#allocation7 + $0x1ac] sm:$0xf]
    %v229 = vld [vmem:[#allocation7 + $0x1b0] sm:$0xf]
    %v230 = vld [vmem:[#allocation7 + $0x1b4] sm:$0xf]
    %v231 = vld [vmem:[#allocation7 + $0x1b8] sm:$0xf]
    %v232 = vld [vmem:[#allocation7 + $0x1bc] sm:$0xf]
    %v233 = vld [vmem:[#allocation7 + $0x1c0] sm:$0xf]
    %v234 = vld [vmem:[#allocation7 + $0x1c4] sm:$0xf]
    %v235 = vld [vmem:[#allocation7 + $0x1c8] sm:$0xf]
    %v236 = vld [vmem:[#allocation7 + $0x1cc] sm:$0xf]
    %v237 = vld [vmem:[#allocation7 + $0x1d0] sm:$0xf]
    %v238 = vld [vmem:[#allocation7 + $0x1d4] sm:$0xf]
    %v239 = vld [vmem:[#allocation7 + $0x1d8] sm:$0xf]
    %v240 = vld [vmem:[#allocation7 + $0x1dc] sm:$0xf]
    %v241 = vld [vmem:[#allocation7 + $0x1e0] sm:$0xf]
    %v242 = vld [vmem:[#allocation7 + $0x1e4] sm:$0xf]
    %v243 = vld [vmem:[#allocation7 + $0x1e8] sm:$0xf]
    %v244 = vld [vmem:[#allocation7 + $0x1ec] sm:$0xf]
    %v245 = vld [vmem:[#allocation7 + $0x1f0] sm:$0xf]
    %v246 = vld [vmem:[#allocation7 + $0x1f4] sm:$0xf]
    %v247 = vld [vmem:[#allocation7 + $0x1f8] sm:$0xf]
    %v248 = vld [vmem:[#allocation7 + $0x1fc] sm:$0xf]
    %v253 = vunpack.c.l.b16 %v117
    %v254 = vunpack.c.h.b16 %v117
    %v255 = vunpack.c.l.b16 %v118
    %v256 = vunpack.c.h.b16 %v118
    %v257 = vunpack.c.l.b16 %v119
    %v258 = vunpack.c.h.b16 %v119
    %v259 = vunpack.c.l.b16 %v120
    %v260 = vunpack.c.h.b16 %v120
    %v261 = vpack.c.b16 %v253, %v253
    %v262 = vpack.c.b16 %v254, %v254
    %v263 = vpack.c.b16 %v255, %v255
    %v264 = vpack.c.b16 %v256, %v256
    %v265 = vpack.c.b16 %v257, %v257
    %v266 = vpack.c.b16 %v258, %v258
    %v267 = vpack.c.b16 %v259, %v259
    %v268 = vpack.c.b16 %v260, %v260
    %v405 = vunpack.c.l.b16 %v121
    %v406 = vunpack.c.l.b16 %v122
    %v407 = vunpack.c.l.b16 %v123
    %v408 = vunpack.c.l.b16 %v124
    %v409 = vunpack.c.l.b16 %v125
    %v410 = vunpack.c.l.b16 %v126
    %v411 = vunpack.c.l.b16 %v127
    %v412 = vunpack.c.l.b16 %v128
    %v413 = vunpack.c.l.b16 %v129
    %v414 = vunpack.c.l.b16 %v130
    %v415 = vunpack.c.l.b16 %v131
    %v416 = vunpack.c.l.b16 %v132
    %v417 = vunpack.c.l.b16 %v133
    %v418 = vunpack.c.l.b16 %v134
    %v419 = vunpack.c.l.b16 %v135
    %v420 = vunpack.c.l.b16 %v136
    %v421 = vunpack.c.l.b16 %v137
    %v422 = vunpack.c.l.b16 %v138
    %v423 = vunpack.c.l.b16 %v139
    %v424 = vunpack.c.l.b16 %v140
    %v425 = vunpack.c.l.b16 %v141
    %v426 = vunpack.c.l.b16 %v142
    %v427 = vunpack.c.l.b16 %v143
    %v428 = vunpack.c.l.b16 %v144
    %v429 = vunpack.c.l.b16 %v145
    %v430 = vunpack.c.l.b16 %v146
    %v431 = vunpack.c.l.b16 %v147
    %v432 = vunpack.c.l.b16 %v148
    %v433 = vunpack.c.l.b16 %v149
    %v434 = vunpack.c.l.b16 %v150
    %v435 = vunpack.c.l.b16 %v151
    %v436 = vunpack.c.l.b16 %v152
    %v437 = vunpack.c.l.b16 %v153
    %v438 = vunpack.c.l.b16 %v154
    %v439 = vunpack.c.l.b16 %v155
    %v440 = vunpack.c.l.b16 %v156
    %v441 = vunpack.c.l.b16 %v157
    %v442 = vunpack.c.l.b16 %v158
    %v443 = vunpack.c.l.b16 %v159
    %v444 = vunpack.c.l.b16 %v160
    %v445 = vunpack.c.l.b16 %v161
    %v446 = vunpack.c.l.b16 %v162
    %v447 = vunpack.c.l.b16 %v163
    %v448 = vunpack.c.l.b16 %v164
    %v449 = vunpack.c.l.b16 %v165
    %v450 = vunpack.c.l.b16 %v166
    %v451 = vunpack.c.l.b16 %v167
    %v452 = vunpack.c.l.b16 %v168
    %v453 = vunpack.c.l.b16 %v169
    %v454 = vunpack.c.l.b16 %v170
    %v455 = vunpack.c.l.b16 %v171
    %v456 = vunpack.c.l.b16 %v172
    %v457 = vunpack.c.l.b16 %v173
    %v458 = vunpack.c.l.b16 %v174
    %v459 = vunpack.c.l.b16 %v175
    %v460 = vunpack.c.l.b16 %v176
    %v461 = vunpack.c.l.b16 %v177
    %v462 = vunpack.c.l.b16 %v178
    %v463 = vunpack.c.l.b16 %v179
    %v464 = vunpack.c.l.b16 %v180
    %v465 = vunpack.c.l.b16 %v181
    %v466 = vunpack.c.l.b16 %v182
    %v467 = vunpack.c.l.b16 %v183
    %v468 = vunpack.c.l.b16 %v184
    %v469 = vunpack.c.l.b16 %v185
    %v470 = vunpack.c.l.b16 %v186
    %v471 = vunpack.c.l.b16 %v187
    %v472 = vunpack.c.l.b16 %v188
    %v473 = vunpack.c.l.b16 %v189
    %v474 = vunpack.c.l.b16 %v190
    %v475 = vunpack.c.l.b16 %v191
    %v476 = vunpack.c.l.b16 %v192
    %v477 = vunpack.c.l.b16 %v193
    %v478 = vunpack.c.l.b16 %v194
    %v479 = vunpack.c.l.b16 %v195
    %v480 = vunpack.c.l.b16 %v196
    %v481 = vunpack.c.l.b16 %v197
    %v482 = vunpack.c.l.b16 %v198
    %v483 = vunpack.c.l.b16 %v199
    %v484 = vunpack.c.l.b16 %v200
    %v485 = vunpack.c.l.b16 %v201
    %v486 = vunpack.c.l.b16 %v202
    %v487 = vunpack.c.l.b16 %v203
    %v488 = vunpack.c.l.b16 %v204
    %v489 = vunpack.c.l.b16 %v205
    %v490 = vunpack.c.l.b16 %v206
    %v491 = vunpack.c.l.b16 %v207
    %v492 = vunpack.c.l.b16 %v208
    %v493 = vunpack.c.l.b16 %v209
    %v494 = vunpack.c.l.b16 %v210
    %v495 = vunpack.c.l.b16 %v211
    %v496 = vunpack.c.l.b16 %v212
    %v497 = vunpack.c.l.b16 %v213
    %v498 = vunpack.c.l.b16 %v214
    %v499 = vunpack.c.l.b16 %v215
    %v500 = vunpack.c.l.b16 %v216
    %v501 = vunpack.c.l.b16 %v217
    %v502 = vunpack.c.l.b16 %v218
    %v503 = vunpack.c.l.b16 %v219
    %v504 = vunpack.c.l.b16 %v220
    %v505 = vunpack.c.l.b16 %v221
    %v506 = vunpack.c.l.b16 %v222
    %v507 = vunpack.c.l.b16 %v223
    %v508 = vunpack.c.l.b16 %v224
    %v509 = vunpack.c.l.b16 %v225
    %v510 = vunpack.c.l.b16 %v226
    %v511 = vunpack.c.l.b16 %v227
    %v512 = vunpack.c.l.b16 %v228
    %v513 = vunpack.c.l.b16 %v229
    %v514 = vunpack.c.l.b16 %v230
    %v515 = vunpack.c.l.b16 %v231
    %v516 = vunpack.c.l.b16 %v232
    %v517 = vunpack.c.l.b16 %v233
    %v518 = vunpack.c.l.b16 %v234
    %v519 = vunpack.c.l.b16 %v235
    %v520 = vunpack.c.l.b16 %v236
    %v521 = vunpack.c.l.b16 %v237
    %v522 = vunpack.c.l.b16 %v238
    %v523 = vunpack.c.l.b16 %v239
    %v524 = vunpack.c.l.b16 %v240
    %v525 = vunpack.c.l.b16 %v241
    %v526 = vunpack.c.l.b16 %v242
    %v527 = vunpack.c.l.b16 %v243
    %v528 = vunpack.c.l.b16 %v244
    %v529 = vunpack.c.l.b16 %v245
    %v530 = vunpack.c.l.b16 %v246
    %v531 = vunpack.c.l.b16 %v247
    %v532 = vunpack.c.l.b16 %v248
    %v533 = vpack.c.b16 %v406, %v405
    %v534 = vpack.c.b16 %v408, %v407
    %v535 = vpack.c.b16 %v410, %v409
    %v536 = vpack.c.b16 %v412, %v411
    %v537 = vpack.c.b16 %v414, %v413
    %v538 = vpack.c.b16 %v416, %v415
    %v539 = vpack.c.b16 %v418, %v417
    %v540 = vpack.c.b16 %v420, %v419
    %v541 = vpack.c.b16 %v422, %v421
    %v542 = vpack.c.b16 %v424, %v423
    %v543 = vpack.c.b16 %v426, %v425
    %v544 = vpack.c.b16 %v428, %v427
    %v545 = vpack.c.b16 %v430, %v429
    %v546 = vpack.c.b16 %v432, %v431
    %v547 = vpack.c.b16 %v434, %v433
    %v548 = vpack.c.b16 %v436, %v435
    %v549 = vpack.c.b16 %v438, %v437
    %v550 = vpack.c.b16 %v440, %v439
    %v551 = vpack.c.b16 %v442, %v441
    %v552 = vpack.c.b16 %v444, %v443
    %v553 = vpack.c.b16 %v446, %v445
    %v554 = vpack.c.b16 %v448, %v447
    %v555 = vpack.c.b16 %v450, %v449
    %v556 = vpack.c.b16 %v452, %v451
    %v557 = vpack.c.b16 %v454, %v453
    %v558 = vpack.c.b16 %v456, %v455
    %v559 = vpack.c.b16 %v458, %v457
    %v560 = vpack.c.b16 %v460, %v459
    %v561 = vpack.c.b16 %v462, %v461
    %v562 = vpack.c.b16 %v464, %v463
    %v563 = vpack.c.b16 %v466, %v465
    %v564 = vpack.c.b16 %v468, %v467
    %v565 = vpack.c.b16 %v470, %v469
    %v566 = vpack.c.b16 %v472, %v471
    %v567 = vpack.c.b16 %v474, %v473
    %v568 = vpack.c.b16 %v476, %v475
    %v569 = vpack.c.b16 %v478, %v477
    %v570 = vpack.c.b16 %v480, %v479
    %v571 = vpack.c.b16 %v482, %v481
    %v572 = vpack.c.b16 %v484, %v483
    %v573 = vpack.c.b16 %v486, %v485
    %v574 = vpack.c.b16 %v488, %v487
    %v575 = vpack.c.b16 %v490, %v489
    %v576 = vpack.c.b16 %v492, %v491
    %v577 = vpack.c.b16 %v494, %v493
    %v578 = vpack.c.b16 %v496, %v495
    %v579 = vpack.c.b16 %v498, %v497
    %v580 = vpack.c.b16 %v500, %v499
    %v581 = vpack.c.b16 %v502, %v501
    %v582 = vpack.c.b16 %v504, %v503
    %v583 = vpack.c.b16 %v506, %v505
    %v584 = vpack.c.b16 %v508, %v507
    %v585 = vpack.c.b16 %v510, %v509
    %v586 = vpack.c.b16 %v512, %v511
    %v587 = vpack.c.b16 %v514, %v513
    %v588 = vpack.c.b16 %v516, %v515
    %v589 = vpack.c.b16 %v518, %v517
    %v590 = vpack.c.b16 %v520, %v519
    %v591 = vpack.c.b16 %v522, %v521
    %v592 = vpack.c.b16 %v524, %v523
    %v593 = vpack.c.b16 %v526, %v525
    %v594 = vpack.c.b16 %v528, %v527
    %v595 = vpack.c.b16 %v530, %v529
    %v596 = vpack.c.b16 %v532, %v531
    %661 = vmatpush.bf16.msra.mxu0 %v540
    %662 = vmatpush.bf16.msra.mxu0 %v539
    %663 = vmatpush.bf16.msra.mxu0 %v538
    %664 = vmatpush.bf16.msra.mxu0 %v537
    %665 = vmatpush.bf16.msra.mxu0 %v536
    %666 = vmatpush.bf16.msra.mxu0 %v535
    %667 = vmatpush.bf16.msra.mxu0 %v534
    %668 = vmatpush.bf16.msra.mxu0 %v533
    %669 = vmatmul.bf16.gmra.mxu0 %v261
    %v670 = vpop.f32.mrf.mxu0
    %v671 = vadd.f32 0.0, %v670
    %v672 = vpop.f32.mrf.mxu0
    %673 = vdwg.mxu0
    %674 = vmatpush.bf16.msra.mxu0 %v548
    %675 = vmatpush.bf16.msra.mxu0 %v547
    %676 = vmatpush.bf16.msra.mxu0 %v546
    %677 = vmatpush.bf16.msra.mxu0 %v545
    %678 = vmatpush.bf16.msra.mxu0 %v544
    %679 = vmatpush.bf16.msra.mxu0 %v543
    %680 = vmatpush.bf16.msra.mxu0 %v542
    %681 = vmatpush.bf16.msra.mxu0 %v541
    %682 = vmatmul.bf16.gmra.mxu0 %v262
    %v683 = vpop.f32.mrf.mxu0
    %v684 = vadd.f32 %v671, %v683
    %v685 = vpop.f32.mrf.mxu0
    %686 = vdwg.mxu0
    %687 = vmatpush.bf16.msra.mxu0 %v556
    %688 = vmatpush.bf16.msra.mxu0 %v555
    %689 = vmatpush.bf16.msra.mxu0 %v554
    %690 = vmatpush.bf16.msra.mxu0 %v553
    %691 = vmatpush.bf16.msra.mxu0 %v552
    %692 = vmatpush.bf16.msra.mxu0 %v551
    %693 = vmatpush.bf16.msra.mxu0 %v550
    %694 = vmatpush.bf16.msra.mxu0 %v549
    %695 = vmatmul.bf16.gmra.mxu0 %v263
    %v696 = vpop.f32.mrf.mxu0
    %v697 = vadd.f32 %v684, %v696
    %v698 = vpop.f32.mrf.mxu0
    %699 = vdwg.mxu0
    %700 = vmatpush.bf16.msra.mxu0 %v564
    %701 = vmatpush.bf16.msra.mxu0 %v563
    %702 = vmatpush.bf16.msra.mxu0 %v562
    %703 = vmatpush.bf16.msra.mxu0 %v561
    %704 = vmatpush.bf16.msra.mxu0 %v560
    %705 = vmatpush.bf16.msra.mxu0 %v559
    %706 = vmatpush.bf16.msra.mxu0 %v558
    %707 = vmatpush.bf16.msra.mxu0 %v557
    %708 = vmatmul.bf16.gmra.mxu0 %v264
    %v709 = vpop.f32.mrf.mxu0
    %v710 = vadd.f32 %v697, %v709
    %v711 = vpop.f32.mrf.mxu0
    %712 = vdwg.mxu0
    %713 = vmatpush.bf16.msra.mxu0 %v572
    %714 = vmatpush.bf16.msra.mxu0 %v571
    %715 = vmatpush.bf16.msra.mxu0 %v570
    %716 = vmatpush.bf16.msra.mxu0 %v569
    %717 = vmatpush.bf16.msra.mxu0 %v568
    %718 = vmatpush.bf16.msra.mxu0 %v567
    %719 = vmatpush.bf16.msra.mxu0 %v566
    %720 = vmatpush.bf16.msra.mxu0 %v565
    %721 = vmatmul.bf16.gmra.mxu0 %v265
    %v722 = vpop.f32.mrf.mxu0
    %v723 = vadd.f32 %v710, %v722
    %v724 = vpop.f32.mrf.mxu0
    %725 = vdwg.mxu0
    %726 = vmatpush.bf16.msra.mxu0 %v580
    %727 = vmatpush.bf16.msra.mxu0 %v579
    %728 = vmatpush.bf16.msra.mxu0 %v578
    %729 = vmatpush.bf16.msra.mxu0 %v577
    %730 = vmatpush.bf16.msra.mxu0 %v576
    %731 = vmatpush.bf16.msra.mxu0 %v575
    %732 = vmatpush.bf16.msra.mxu0 %v574
    %733 = vmatpush.bf16.msra.mxu0 %v573
    %734 = vmatmul.bf16.gmra.mxu0 %v266
    %v735 = vpop.f32.mrf.mxu0
    %v736 = vadd.f32 %v723, %v735
    %v737 = vpop.f32.mrf.mxu0
    %738 = vdwg.mxu0
    %739 = vmatpush.bf16.msra.mxu0 %v588
    %740 = vmatpush.bf16.msra.mxu0 %v587
    %741 = vmatpush.bf16.msra.mxu0 %v586
    %742 = vmatpush.bf16.msra.mxu0 %v585
    %743 = vmatpush.bf16.msra.mxu0 %v584
    %744 = vmatpush.bf16.msra.mxu0 %v583
    %745 = vmatpush.bf16.msra.mxu0 %v582
    %746 = vmatpush.bf16.msra.mxu0 %v581
    %747 = vmatmul.bf16.gmra.mxu0 %v267
    %v748 = vpop.f32.mrf.mxu0
    %v749 = vadd.f32 %v736, %v748
    %v750 = vpop.f32.mrf.mxu0
    %751 = vdwg.mxu0
    %752 = vmatpush.bf16.msra.mxu0 %v596
    %753 = vmatpush.bf16.msra.mxu0 %v595
    %754 = vmatpush.bf16.msra.mxu0 %v594
    %755 = vmatpush.bf16.msra.mxu0 %v593
    %756 = vmatpush.bf16.msra.mxu0 %v592
    %757 = vmatpush.bf16.msra.mxu0 %v591
    %758 = vmatpush.bf16.msra.mxu0 %v590
    %759 = vmatpush.bf16.msra.mxu0 %v589
    %760 = vmatmul.bf16.gmra.mxu0 %v268
    %v761 = vpop.f32.mrf.mxu0
    %v762 = vadd.f32 %v749, %v761
    %v763 = vpop.f32.mrf.mxu0
    %764 = vdwg.mxu0
    %v765 = vld [vmem:[#allocation5] sm:$0xff]
    %v766 = vld [vmem:[#allocation8] sm:$0xf]
    %v767 = vld [vmem:[#allocation8 + $0x4] sm:$0xf]
    %v768 = vld [vmem:[#allocation8 + $0x8] sm:$0xf]
    %v769 = vld [vmem:[#allocation8 + $0xc] sm:$0xf]
    %v770 = vld [vmem:[#allocation8 + $0x10] sm:$0xf]
    %v771 = vld [vmem:[#allocation8 + $0x14] sm:$0xf]
    %v772 = vld [vmem:[#allocation8 + $0x18] sm:$0xf]
    %v773 = vld [vmem:[#allocation8 + $0x1c] sm:$0xf]
    %v774 = vld [vmem:[#allocation8 + $0x20] sm:$0xf]
    %v775 = vld [vmem:[#allocation8 + $0x24] sm:$0xf]
    %v776 = vld [vmem:[#allocation8 + $0x28] sm:$0xf]
    %v777 = vld [vmem:[#allocation8 + $0x2c] sm:$0xf]
    %v778 = vld [vmem:[#allocation8 + $0x30] sm:$0xf]
    %v779 = vld [vmem:[#allocation8 + $0x34] sm:$0xf]
    %v780 = vld [vmem:[#allocation8 + $0x38] sm:$0xf]
    %v781 = vld [vmem:[#allocation8 + $0x3c] sm:$0xf]
    %v782 = vld [vmem:[#allocation8 + $0x40] sm:$0xf]
    %v783 = vld [vmem:[#allocation8 + $0x44] sm:$0xf]
    %v784 = vld [vmem:[#allocation8 + $0x48] sm:$0xf]
    %v785 = vld [vmem:[#allocation8 + $0x4c] sm:$0xf]
    %v786 = vld [vmem:[#allocation8 + $0x50] sm:$0xf]
    %v787 = vld [vmem:[#allocation8 + $0x54] sm:$0xf]
    %v788 = vld [vmem:[#allocation8 + $0x58] sm:$0xf]
    %v789 = vld [vmem:[#allocation8 + $0x5c] sm:$0xf]
    %v790 = vld [vmem:[#allocation8 + $0x60] sm:$0xf]
    %v791 = vld [vmem:[#allocation8 + $0x64] sm:$0xf]
    %v792 = vld [vmem:[#allocation8 + $0x68] sm:$0xf]
    %v793 = vld [vmem:[#allocation8 + $0x6c] sm:$0xf]
    %v794 = vld [vmem:[#allocation8 + $0x70] sm:$0xf]
    %v795 = vld [vmem:[#allocation8 + $0x74] sm:$0xf]
    %v796 = vld [vmem:[#allocation8 + $0x78] sm:$0xf]
    %v797 = vld [vmem:[#allocation8 + $0x7c] sm:$0xf]
    %v799 = vunpack.c.l.b16 %v765
    %v800 = vunpack.c.h.b16 %v765
    %v801 = vpack.c.b16 %v799, %v799
    %v802 = vpack.c.b16 %v800, %v800
    %v837 = vunpack.c.l.b16 %v766
    %v838 = vunpack.c.l.b16 %v767
    %v839 = vunpack.c.l.b16 %v768
    %v840 = vunpack.c.l.b16 %v769
    %v841 = vunpack.c.l.b16 %v770
    %v842 = vunpack.c.l.b16 %v771
    %v843 = vunpack.c.l.b16 %v772
    %v844 = vunpack.c.l.b16 %v773
    %v845 = vunpack.c.l.b16 %v774
    %v846 = vunpack.c.l.b16 %v775
    %v847 = vunpack.c.l.b16 %v776
    %v848 = vunpack.c.l.b16 %v777
    %v849 = vunpack.c.l.b16 %v778
    %v850 = vunpack.c.l.b16 %v779
    %v851 = vunpack.c.l.b16 %v780
    %v852 = vunpack.c.l.b16 %v781
    %v853 = vunpack.c.l.b16 %v782
    %v854 = vunpack.c.l.b16 %v783
    %v855 = vunpack.c.l.b16 %v784
    %v856 = vunpack.c.l.b16 %v785
    %v857 = vunpack.c.l.b16 %v786
    %v858 = vunpack.c.l.b16 %v787
    %v859 = vunpack.c.l.b16 %v788
    %v860 = vunpack.c.l.b16 %v789
    %v861 = vunpack.c.l.b16 %v790
    %v862 = vunpack.c.l.b16 %v791
    %v863 = vunpack.c.l.b16 %v792
    %v864 = vunpack.c.l.b16 %v793
    %v865 = vunpack.c.l.b16 %v794
    %v866 = vunpack.c.l.b16 %v795
    %v867 = vunpack.c.l.b16 %v796
    %v868 = vunpack.c.l.b16 %v797
    %v869 = vpack.c.b16 %v838, %v837
    %v870 = vpack.c.b16 %v840, %v839
    %v871 = vpack.c.b16 %v842, %v841
    %v872 = vpack.c.b16 %v844, %v843
    %v873 = vpack.c.b16 %v846, %v845
    %v874 = vpack.c.b16 %v848, %v847
    %v875 = vpack.c.b16 %v850, %v849
    %v876 = vpack.c.b16 %v852, %v851
    %v877 = vpack.c.b16 %v854, %v853
    %v878 = vpack.c.b16 %v856, %v855
    %v879 = vpack.c.b16 %v858, %v857
    %v880 = vpack.c.b16 %v860, %v859
    %v881 = vpack.c.b16 %v862, %v861
    %v882 = vpack.c.b16 %v864, %v863
    %v883 = vpack.c.b16 %v866, %v865
    %v884 = vpack.c.b16 %v868, %v867
    %901 = vmatpush.bf16.msra.mxu0 %v876
    %902 = vmatpush.bf16.msra.mxu0 %v875
    %903 = vmatpush.bf16.msra.mxu0 %v874
    %904 = vmatpush.bf16.msra.mxu0 %v873
    %905 = vmatpush.bf16.msra.mxu0 %v872
    %906 = vmatpush.bf16.msra.mxu0 %v871
    %907 = vmatpush.bf16.msra.mxu0 %v870
    %908 = vmatpush.bf16.msra.mxu0 %v869
    %909 = vmatmul.bf16.gmra.mxu0 %v801
    %v910 = vpop.f32.mrf.mxu0
    %v911 = vadd.f32 0.0, %v910
    %v912 = vpop.f32.mrf.mxu0
    %913 = vdwg.mxu0
    %914 = vmatpush.bf16.msra.mxu0 %v884
    %915 = vmatpush.bf16.msra.mxu0 %v883
    %916 = vmatpush.bf16.msra.mxu0 %v882
    %917 = vmatpush.bf16.msra.mxu0 %v881
    %918 = vmatpush.bf16.msra.mxu0 %v880
    %919 = vmatpush.bf16.msra.mxu0 %v879
    %920 = vmatpush.bf16.msra.mxu0 %v878
    %921 = vmatpush.bf16.msra.mxu0 %v877
    %922 = vmatmul.bf16.gmra.mxu0 %v802
    %v923 = vpop.f32.mrf.mxu0
    %v924 = vadd.f32 %v911, %v923
    %v925 = vpop.f32.mrf.mxu0
    %926 = vdwg.mxu0
    %v927 = vld [vmem:[#allocation10] sm:$0xff]
    %v928 = vld [vmem:[#allocation10 + $0x8] sm:$0xff]
    %v929 = vld [vmem:[#allocation10 + $0x10] sm:$0xff]
    %v930 = vld [vmem:[#allocation10 + $0x18] sm:$0xff]
    %v931 = vld [vmem:[#allocation10 + $0x20] sm:$0xff]
    %v932 = vld [vmem:[#allocation10 + $0x28] sm:$0xff]
    %v933 = vld [vmem:[#allocation10 + $0x30] sm:$0xff]
    %v934 = vld [vmem:[#allocation10 + $0x38] sm:$0xff]
    %v935 = vld [vmem:[#allocation10 + $0x40] sm:$0xff]
    %v936 = vld [vmem:[#allocation10 + $0x48] sm:$0xff]
    %v937 = vld [vmem:[#allocation10 + $0x50] sm:$0xff]
    %v938 = vld [vmem:[#allocation10 + $0x58] sm:$0xff]
    %v939 = vld [vmem:[#allocation10 + $0x60] sm:$0xff]
    %v940 = vld [vmem:[#allocation10 + $0x68] sm:$0xff]
    %v941 = vld [vmem:[#allocation10 + $0x70] sm:$0xff]
    %v942 = vld [vmem:[#allocation10 + $0x78] sm:$0xff]
    %v943 = vld [vmem:[#allocation11] sm:$0xff]
    %v944 = vld [vmem:[#allocation11 + $0x8] sm:$0xff]
    %v945 = vld [vmem:[#allocation11 + $0x10] sm:$0xff]
    %v946 = vld [vmem:[#allocation11 + $0x18] sm:$0xff]
    %v947 = vld [vmem:[#allocation11 + $0x20] sm:$0xff]
    %v948 = vld [vmem:[#allocation11 + $0x28] sm:$0xff]
    %v949 = vld [vmem:[#allocation11 + $0x30] sm:$0xff]
    %v950 = vld [vmem:[#allocation11 + $0x38] sm:$0xff]
    %v951 = vld [vmem:[#allocation11 + $0x40] sm:$0xff]
    %v952 = vld [vmem:[#allocation11 + $0x48] sm:$0xff]
    %v953 = vld [vmem:[#allocation11 + $0x50] sm:$0xff]
    %v954 = vld [vmem:[#allocation11 + $0x58] sm:$0xff]
    %v955 = vld [vmem:[#allocation11 + $0x60] sm:$0xff]
    %v956 = vld [vmem:[#allocation11 + $0x68] sm:$0xff]
    %v957 = vld [vmem:[#allocation11 + $0x70] sm:$0xff]
    %v958 = vld [vmem:[#allocation11 + $0x78] sm:$0xff]
    %959 = vmatpush.msra.mxu0 %v958
    %960 = vmatpush.msra.mxu0 %v957
    %961 = vmatpush.msra.mxu0 %v956
    %962 = vmatpush.msra.mxu0 %v955
    %963 = vmatpush.msra.mxu0 %v954
    %964 = vmatpush.msra.mxu0 %v953
    %965 = vmatpush.msra.mxu0 %v952
    %966 = vmatpush.msra.mxu0 %v951
    %967 = vmatpush.msra.mxu0 %v950
    %968 = vmatpush.msra.mxu0 %v949
    %969 = vmatpush.msra.mxu0 %v948
    %970 = vmatpush.msra.mxu0 %v947
    %971 = vmatpush.msra.mxu0 %v946
    %972 = vmatpush.msra.mxu0 %v945
    %973 = vmatpush.msra.mxu0 %v944
    %974 = vmatpush.msra.mxu0 %v943
    %975 = vmatmul.f32.gmra.mxu0 %v924
    %v976 = vpop.f32.mrf.mxu0
    %v977 = vadd.f32 0.0, %v976
    %978 = vdwg.mxu0
    %979 = vmatpush.msra.mxu0 %v942
    %980 = vmatpush.msra.mxu0 %v941
    %981 = vmatpush.msra.mxu0 %v940
    %982 = vmatpush.msra.mxu0 %v939
    %983 = vmatpush.msra.mxu0 %v938
    %984 = vmatpush.msra.mxu0 %v937
    %985 = vmatpush.msra.mxu0 %v936
    %986 = vmatpush.msra.mxu0 %v935
    %987 = vmatpush.msra.mxu0 %v934
    %988 = vmatpush.msra.mxu0 %v933
    %989 = vmatpush.msra.mxu0 %v932
    %990 = vmatpush.msra.mxu0 %v931
    %991 = vmatpush.msra.mxu0 %v930
    %992 = vmatpush.msra.mxu0 %v929
    %993 = vmatpush.msra.mxu0 %v928
    %994 = vmatpush.msra.mxu0 %v927
    %995 = vmatmul.f32.gmra.mxu0 %v762
    %v996 = vpop.f32.mrf.mxu0
    %v997 = vadd.f32 %v977, %v996
    %998 = vdwg.mxu0
    %v999 = vld [vmem:[%s6] sm:$0x1]
    %v1001 = vperm.slane %v999, 0
    %v1003 = vadd.f32 %v997, %v1001
    %1004 = vmax.xlane.f32.xlu0 %v1003
    %v1005 = vpop.xlane.xlu0 %1004
    %v1006 = vsub.f32 %v1003, %v1005
    %v1007 = vmul.f32 %v1006, 1.442695
    %v1008 = vpow.pop %v1007
    %1009 = vadd.xlane.f32.xlu0 %v1008
    %v1010 = vpop.xlane.xlu0 %1009
    %v1011 = vlog2.pop %v1010
    %v1012 = vmul.f32 %v1011, 0.6931472
    %v1013 = vsub.f32 %v1006, %v1012
    %1014 = vst [vmem:[#allocation13] sm:$0xff] %v1013
    // Predicated region
    $region54: #{tpu_custom_call.1} parent=1 // pred_check
      _
    $region55: #{tpu_custom_call.1} parent=1 // pred_check_branch
      %1016 = sbr.rel (0) target = $region57
    $region56: #{tpu_custom_call.1} parent=1 // pred_region
      %1018 = vsyncadd [#allocation4], 0
      %s1020 = sshll.u32 [#allocation13], 4
      %s1021 = int_to_ptr.vmem [resolvable:$true] %s1020
      %s1022 = sshll.u32 %s7, 4
      %s1023 = int_to_ptr.hbm [resolvable:$true] %s1022
      %1025 = dma.vmem_to_hbm [thread:$0]  %s1021, 128, %s1023, [#allocation4]
    $region57: #{tpu_custom_call.1} parent=1 // pred_fallthru
      _
    // Predicated region
    $region58: #{tpu_custom_call.1} parent=1 // pred_check
      _
    $region59: #{tpu_custom_call.1} parent=1 // pred_check_branch
      %1027 = sbr.rel (0) target = $region61
    $region60: #{tpu_custom_call.1} parent=1 // pred_region
      %1029 = dma.done [#allocation4], 128
    $region61: #{tpu_custom_call.1} parent=1 // pred_fallthru
      _
    %1030 = vsyncpa [#allocation3], 1
    %1031 = vsyncpa [#allocation6], 1
    %1032 = vsyncpa [#allocation9], 1
    %1033 = vsyncpa [#allocation12], 1
    %1034 = vsyncpa [#allocation4], 1

</llo_original>
